<compile_context>
chip_gen: v7x
topology: tpu7x:2x2x1
jax: 0.10.0
libtpu: 0.0.40
codegen_flags: <defaults>
</compile_context>

<pallas_src>
import jax
import jax.numpy as jnp
from jax import lax
from jax.experimental import pallas as pl
from jax.experimental.pallas import tpu as pltpu

# ----------------------------- model hyper-params -----------------------------
BATCH = 2          # B
CHANNELS = 4       # C
SPATIAL = 16       # H = W
PATCH = 8          # patch size of the synthetic "visual encoder"
NUM_PATCHES = (SPATIAL // PATCH) ** 2            # P = 4
PATCH_DIM = CHANNELS * PATCH * PATCH             # C*ph*pw = 256  (lane-aligned K)
EMBED_DIM = 32     # logical encoder width / feature dim fed to the head
NUM_CLASSES = 10   # logical number of classes

# lane-dense padded widths (multiples of 128 -> unmasked stores, full MXU N width).
# NOTE(scale-out): keep 128 on v5e (4x128 MXU); bump to 256 on v6e/v7x (2x256 MXU)
# when the shapes are real.
D_PAD = 128
NC_PAD = 128

ROWS = BATCH * NUM_PATCHES   # 8 token rows fed to the patch-embedding matmul
B_PAD = 8                    # sublane-padded batch so the output store is a full vreg


# --------------------------------- the kernel ---------------------------------
def image_classifier_kernel(
    patches_ref,   # (ROWS, PATCH_DIM)    bf16  flattened image patches
    w_patch_ref,   # (PATCH_DIM, D_PAD)   bf16  patch-embedding weight (stride-PATCH conv)
    w_pw_ref,      # (D_PAD, 2*D_PAD)     bf16  [ w_proj | w_head ] packed, zero padded
    biases_ref,    # (3, 128)             f32   rows: [b_patch; b_proj; b_head] zero padded
    out_ref,       # (B_PAD, NC_PAD)      f32   padded logits (rows 0..BATCH-1 valid)
):
    # ---- image_encoder ----
    # patch embedding: bf16 MXU matmul with f32 accumulation
    tok = jnp.dot(patches_ref[...], w_patch_ref[...],
                  preferred_element_type=jnp.float32)
    tok = tok + biases_ref[0:1, :]
    # TODO(synk): PyTorch nn.GELU defaults to exact erf GELU; the tanh approximation is
    # used in this synthetic encoder stand-in (the real encoder is a full CLIP ViT).
    tok = jax.nn.gelu(tok, approximate=True)                     # (ROWS, D_PAD) f32

    # per-image mean-pool over patches, emitted directly as a sublane-padded
    # (B_PAD, D_PAD) matrix. Pooling matrix is built in-registers from 2-D iota
    # (no HBM input, no in-kernel reshape/relayout of tok); rows >= BATCH are zero.
    row = lax.broadcasted_iota(jnp.int32, (B_PAD, ROWS), 0)
    col = lax.broadcasted_iota(jnp.int32, (B_PAD, ROWS), 1)
    start = row * NUM_PATCHES
    sel = (col >= start) & (col < start + NUM_PATCHES) & (row < BATCH)
    pool = jnp.where(sel, 1.0 / NUM_PATCHES, 0.0).astype(jnp.float32)
    pooled = jnp.dot(pool, tok, preferred_element_type=jnp.float32)   # (B_PAD, D_PAD)

    # encoder output projection -> image features (bf16 MXU, f32 accumulation).
    # w_proj is a free static slice of the packed weight ref.
    feat = jnp.dot(pooled.astype(jnp.bfloat16), w_pw_ref[:, 0:D_PAD],
                   preferred_element_type=jnp.float32)
    feat = feat + biases_ref[1:2, :]                             # (B_PAD, D_PAD) f32

    # ---- classification_head ----
    # mask the padded feature lanes so the L2 norm is exactly over the logical EMBED_DIM
    # features (robust even if a loaded checkpoint were padded with non-zeros).
    lane = lax.broadcasted_iota(jnp.int32, feat.shape, 1)
    feat = jnp.where(lane < EMBED_DIM, feat, 0.0)

    # L2-normalize; match PyTorch F.normalize: x / max(||x||, eps), eps = 1e-12.
    # rsqrt on the clamped sum of squares runs on the EUP slot (no VALU divide).
    sq = jnp.sum(feat * feat, axis=-1, keepdims=True)
    inv_norm = lax.rsqrt(jnp.maximum(sq, 1e-24))
    feat = feat * inv_norm

    logits = jnp.dot(feat.astype(jnp.bfloat16), w_pw_ref[:, D_PAD:2 * D_PAD],
                     preferred_element_type=jnp.float32)
    # full (8, 128) f32 tile -> single unmasked vst (rows >= BATCH are don't-care)
    out_ref[...] = logits + biases_ref[2:3, :]


# --------------------------------- the wrapper --------------------------------
def _full_spec(shape):
    # whole-array block, single grid step
    return pl.BlockSpec(shape, lambda: (0,) * len(shape))


@jax.jit
def image_classifier_forward(x_nchw, kparams):
    B, C, H, W = x_nchw.shape
    assert (B, C, H, W) == (BATCH, CHANNELS, SPATIAL, SPATIAL)
    ph = pw = PATCH
    hp, wp = H // ph, W // pw
    P = hp * wp

    # ---- glue: NCHW -> (B*P, C*ph*pw) patch matrix (layout only, no compute) ----
    # allow_input_fusion below lets XLA fuse this transpose/reshape/cast into the
    # pallas_call's input instead of materializing the patch matrix in HBM.
    x = x_nchw.reshape(B, C, hp, ph, wp, pw)
    x = jnp.transpose(x, (0, 2, 4, 1, 3, 5))            # B, hp, wp, C, ph, pw
    patches = x.reshape(B * P, C * ph * pw).astype(jnp.bfloat16)

    inputs = (
        patches,
        kparams["w_patch"],
        kparams["w_pw"],      # packed [w_proj | w_head]
        kparams["biases"],
    )

    # advisory cost hint: this exact shape is launch/DMA-latency bound, not compute bound
    flops = 2 * (ROWS * PATCH_DIM * D_PAD            # patch embedding
                 + B_PAD * ROWS * D_PAD              # mean-pool matmul
                 + B_PAD * D_PAD * D_PAD             # encoder projection
                 + B_PAD * D_PAD * NC_PAD)           # classification head
    transcendentals = ROWS * D_PAD + B_PAD           # GELU tanh + rsqrt
    bytes_accessed = sum(a.size * a.dtype.itemsize for a in inputs) + B_PAD * NC_PAD * 4

    out_padded = pl.pallas_call(
        image_classifier_kernel,
        out_shape=jax.ShapeDtypeStruct((B_PAD, NC_PAD), jnp.float32),
        in_specs=[_full_spec(a.shape) for a in inputs],
        out_specs=_full_spec((B_PAD, NC_PAD)),
        cost_estimate=pl.CostEstimate(flops=flops,
                                      transcendentals=transcendentals,
                                      bytes_accessed=bytes_accessed),
        # NOTE: single grid step at this toy size. At real B / P, add grid over row tiles
        # of B*P with dimension_semantics=("parallel",) so v7x's second TensorCore is used,
        # re-deriving tiles against 64 MiB VMEM on v7x (e.g. 256-row bf16 tiles) vs the
        # 512-1024 row tiles / N=256 padding that v6e's 128 MiB VMEM and 256-wide MXU afford.
        compiler_params=pltpu.CompilerParams(
            allow_input_fusion=[True, False, False, False],
            vmem_limit_bytes=32 * 1024 * 1024,   # v5e scoped default is only 16 MiB
        ),
    )(*inputs)

    # drop the sublane/lane padding -> logical (B, NUM_CLASSES) logits
    return out_padded[:BATCH, :NUM_CLASSES]


# ------------------------- deterministic parameter init ------------------------
def init_params(key):
    """Logical (unpadded, f32) parameters, as the PyTorch module would hold them."""
    ks = jax.random.split(key, 3)
    scale = 0.02
    return {
        "w_patch": scale * jax.random.normal(ks[0], (PATCH_DIM, EMBED_DIM), jnp.float32),
        "b_patch": jnp.zeros((EMBED_DIM,), jnp.float32),
        "w_proj":  scale * jax.random.normal(ks[1], (EMBED_DIM, EMBED_DIM), jnp.float32),
        "b_proj":  jnp.zeros((EMBED_DIM,), jnp.float32),
        "w_head":  scale * jax.random.normal(ks[2], (EMBED_DIM, NUM_CLASSES), jnp.float32),
        "b_head":  jnp.zeros((NUM_CLASSES,), jnp.float32),
    }


def prepare_params(params):
    """Zero-pad weights to lane-dense widths (math unchanged), cast matmul operands to
    bf16 (f32 accumulation in-kernel), pack w_proj|w_head into one buffer and the three
    tiny biases into one (3, 128) f32 buffer -> 4 input DMAs total."""
    w_patch = jnp.pad(params["w_patch"], ((0, 0), (0, D_PAD - EMBED_DIM)))
    w_proj = jnp.pad(params["w_proj"], ((0, D_PAD - EMBED_DIM), (0, D_PAD - EMBED_DIM)))
    w_head = jnp.pad(params["w_head"], ((0, D_PAD - EMBED_DIM), (0, NC_PAD - NUM_CLASSES)))
    w_pw = jnp.concatenate([w_proj, w_head], axis=1)             # (D_PAD, 2*D_PAD)
    biases = jnp.stack(
        [
            jnp.pad(params["b_patch"], (0, D_PAD - EMBED_DIM)),
            jnp.pad(params["b_proj"], (0, D_PAD - EMBED_DIM)),
            jnp.pad(params["b_head"], (0, NC_PAD - NUM_CLASSES)),
        ],
        axis=0,
    ).astype(jnp.float32)                                        # (3, 128) f32
    return {
        "w_patch": w_patch.astype(jnp.bfloat16),
        "w_pw": w_pw.astype(jnp.bfloat16),
        "biases": biases,
    }


# ------------------------------------ main -------------------------------------
if __name__ == "__main__":
    key = jax.random.PRNGKey(0)
    k_x, k_p = jax.random.split(key)

    # NCHW input, matching the PyTorch convention
    x = jax.random.normal(k_x, (BATCH, CHANNELS, SPATIAL, SPATIAL), jnp.float32)
    params = init_params(k_p)
    kparams = prepare_params(params)

    logits = image_classifier_forward(x, kparams)
    jax.block_until_ready(logits)

    assert logits.shape == (BATCH, NUM_CLASSES)
    assert logits.dtype == jnp.float32
    # TODO(synk): the real image_encoder is a full CLIP ViT; here it is a representative
    # synthetic encoder (patch-embed conv -> GELU -> mean-pool -> projection).
    print("KERNEL_OK")
</pallas_src>

<mosaic_0001>
module attributes {stable_mosaic.version = 11 : i64} {
  func.func @image_classifier_kernel(%arg0: memref<8x256xbf16, #tpu.memory_space<vmem>>, %arg1: memref<256x128xbf16, #tpu.memory_space<vmem>>, %arg2: memref<128x256xbf16, #tpu.memory_space<vmem>>, %arg3: memref<3x128xf32, #tpu.memory_space<vmem>>, %arg4: memref<8x128xf32, #tpu.memory_space<vmem>>) attributes {dimension_semantics = [], scalar_prefetch = 0 : i64, scratch_operands = 0 : i64, tpu.core_type = #tpu.core_type<tc>} {
    %c0 = arith.constant 0 : index
    %c0_0 = arith.constant 0 : index
    %0 = vector.load %arg0[%c0, %c0_0] : memref<8x256xbf16, #tpu.memory_space<vmem>>, vector<8x256xbf16>
    %c0_1 = arith.constant 0 : index
    %c0_2 = arith.constant 0 : index
    %1 = vector.load %arg1[%c0_1, %c0_2] : memref<256x128xbf16, #tpu.memory_space<vmem>>, vector<256x128xbf16>
    %cst = arith.constant dense<0.000000e+00> : vector<8x128xf32>
    %2 = tpu.matmul %0, %1, %cst {dimension_numbers = #tpu.dot_dimension_numbers<[1], [0], [0], [1], [0, 0, 1, 1], [], []>} : vector<8x256xbf16>, vector<256x128xbf16>, vector<8x128xf32> -> vector<8x128xf32>
    %c0_3 = arith.constant 0 : index
    %c0_4 = arith.constant 0 : index
    %3 = vector.load %arg3[%c0_3, %c0_4] : memref<3x128xf32, #tpu.memory_space<vmem>>, vector<1x128xf32>
    %4 = vector.broadcast %3 : vector<1x128xf32> to vector<8x128xf32>
    %5 = arith.addf %2, %4 : vector<8x128xf32>
    %6 = arith.mulf %5, %5 : vector<8x128xf32>
    %7 = arith.mulf %5, %6 : vector<8x128xf32>
    %cst_5 = arith.constant 4.471500e-02 : f32
    %8 = vector.broadcast %cst_5 : f32 to vector<8x128xf32>
    %9 = arith.mulf %8, %7 : vector<8x128xf32>
    %10 = arith.addf %5, %9 : vector<8x128xf32>
    %cst_6 = arith.constant 0.797884583 : f32
    %11 = vector.broadcast %cst_6 : f32 to vector<8x128xf32>
    %12 = arith.mulf %11, %10 : vector<8x128xf32>
    %13 = math.tanh %12 : vector<8x128xf32>
    %cst_7 = arith.constant 1.000000e+00 : f32
    %14 = vector.broadcast %cst_7 : f32 to vector<8x128xf32>
    %15 = arith.addf %14, %13 : vector<8x128xf32>
    %cst_8 = arith.constant 5.000000e-01 : f32
    %16 = vector.broadcast %cst_8 : f32 to vector<8x128xf32>
    %17 = arith.mulf %16, %15 : vector<8x128xf32>
    %18 = arith.mulf %5, %17 : vector<8x128xf32>
    %19 = tpu.iota {dimensions = array<i32: 0>} : vector<8x8xi32>
    %20 = tpu.iota {dimensions = array<i32: 1>} : vector<8x8xi32>
    %c4_i32 = arith.constant 4 : i32
    %21 = vector.broadcast %c4_i32 : i32 to vector<8x8xi32>
    %22 = arith.muli %19, %21 : vector<8x8xi32>
    %23 = arith.cmpi sge, %20, %22 : vector<8x8xi32>
    %c4_i32_9 = arith.constant 4 : i32
    %24 = vector.broadcast %c4_i32_9 : i32 to vector<8x8xi32>
    %25 = arith.addi %22, %24 : vector<8x8xi32>
    %26 = arith.cmpi slt, %20, %25 : vector<8x8xi32>
    %27 = arith.andi %23, %26 : vector<8x8xi1>
    %c2_i32 = arith.constant 2 : i32
    %28 = vector.broadcast %c2_i32 : i32 to vector<8x8xi32>
    %29 = arith.cmpi slt, %19, %28 : vector<8x8xi32>
    %30 = arith.andi %27, %29 : vector<8x8xi1>
    %cst_10 = arith.constant 2.500000e-01 : f32
    %cst_11 = arith.constant 0.000000e+00 : f32
    %31 = vector.broadcast %cst_10 : f32 to vector<8x8xf32>
    %32 = vector.broadcast %cst_11 : f32 to vector<8x8xf32>
    %33 = arith.select %30, %31, %32 : vector<8x8xi1>, vector<8x8xf32>
    %cst_12 = arith.constant dense<0.000000e+00> : vector<8x128xf32>
    %34 = tpu.matmul %33, %18, %cst_12 {dimension_numbers = #tpu.dot_dimension_numbers<[1], [0], [0], [1], [0, 0, 1, 1], [], []>} : vector<8x8xf32>, vector<8x128xf32>, vector<8x128xf32> -> vector<8x128xf32>
    %35 = arith.truncf %34 : vector<8x128xf32> to vector<8x128xbf16>
    %c0_13 = arith.constant 0 : index
    %c0_14 = arith.constant 0 : index
    %36 = vector.load %arg2[%c0_13, %c0_14] : memref<128x256xbf16, #tpu.memory_space<vmem>>, vector<128x128xbf16>
    %cst_15 = arith.constant dense<0.000000e+00> : vector<8x128xf32>
    %37 = tpu.matmul %35, %36, %cst_15 {dimension_numbers = #tpu.dot_dimension_numbers<[1], [0], [0], [1], [0, 0, 1, 1], [], []>} : vector<8x128xbf16>, vector<128x128xbf16>, vector<8x128xf32> -> vector<8x128xf32>
    %c1 = arith.constant 1 : index
    %c0_16 = arith.constant 0 : index
    %38 = vector.load %arg3[%c1, %c0_16] : memref<3x128xf32, #tpu.memory_space<vmem>>, vector<1x128xf32>
    %39 = vector.broadcast %38 : vector<1x128xf32> to vector<8x128xf32>
    %40 = arith.addf %37, %39 : vector<8x128xf32>
    %41 = tpu.iota {dimensions = array<i32: 1>} : vector<8x128xi32>
    %c32_i32 = arith.constant 32 : i32
    %42 = vector.broadcast %c32_i32 : i32 to vector<8x128xi32>
    %43 = arith.cmpi slt, %41, %42 : vector<8x128xi32>
    %cst_17 = arith.constant 0.000000e+00 : f32
    %44 = vector.broadcast %cst_17 : f32 to vector<8x128xf32>
    %45 = arith.select %43, %40, %44 : vector<8x128xi1>, vector<8x128xf32>
    %46 = arith.mulf %45, %45 : vector<8x128xf32>
    %cst_18 = arith.constant dense<0.000000e+00> : vector<8xf32>
    %47 = vector.multi_reduction <add>, %46, %cst_18 [1] : vector<8x128xf32> to vector<8xf32>
    %48 = vector.shape_cast %47 : vector<8xf32> to vector<8x1xf32>
    %cst_19 = arith.constant 1.000000e-24 : f32
    %49 = vector.broadcast %cst_19 : f32 to vector<8x1xf32>
    %50 = arith.maximumf %48, %49 : vector<8x1xf32>
    %51 = math.rsqrt %50 : vector<8x1xf32>
    %52 = vector.broadcast %51 : vector<8x1xf32> to vector<8x128xf32>
    %53 = arith.mulf %45, %52 : vector<8x128xf32>
    %54 = arith.truncf %53 : vector<8x128xf32> to vector<8x128xbf16>
    %c0_20 = arith.constant 0 : index
    %c128 = arith.constant 128 : index
    %55 = vector.load %arg2[%c0_20, %c128] : memref<128x256xbf16, #tpu.memory_space<vmem>>, vector<128x128xbf16>
    %cst_21 = arith.constant dense<0.000000e+00> : vector<8x128xf32>
    %56 = tpu.matmul %54, %55, %cst_21 {dimension_numbers = #tpu.dot_dimension_numbers<[1], [0], [0], [1], [0, 0, 1, 1], [], []>} : vector<8x128xbf16>, vector<128x128xbf16>, vector<8x128xf32> -> vector<8x128xf32>
    %c2 = arith.constant 2 : index
    %c0_22 = arith.constant 0 : index
    %57 = vector.load %arg3[%c2, %c0_22] : memref<3x128xf32, #tpu.memory_space<vmem>>, vector<1x128xf32>
    %58 = vector.broadcast %57 : vector<1x128xf32> to vector<8x128xf32>
    %59 = arith.addf %56, %58 : vector<8x128xf32>
    %c0_23 = arith.constant 0 : index
    %c0_24 = arith.constant 0 : index
    %60 = vector.load %arg4[%c0_23, %c0_24] : memref<8x128xf32, #tpu.memory_space<vmem>>, vector<8x128xf32>
    tpu.vector_store %arg4[%c0_23, %c0_24], %59 {strides = array<i32>} : memref<8x128xf32, #tpu.memory_space<vmem>>, vector<8x128xf32>,
    return
  }
}

</mosaic_0001>

<llo_original>
// kernel: image_classifier_forward.1
$region0: #{image_classifier_forward.1}
  #allocation0 [shape = 'u32[]', space=smem, size = 0x4, offset = 0x4, fixed_abs, tag = 'smem constant byte address 0x4 - core index']
  #allocation1 [shape = 'u32[144,128]{1,0:T(1,128)}', space=vmem, size = 0x12000, scoped, tag = 'internal scratch']
  %s0 = inlined_call_operand.vmem [shape: bf16[8,256], index: 0, kind: input, shape index: {}]
  %s1 = inlined_call_operand.vmem [shape: bf16[256,128], index: 1, kind: input, shape index: {}]
  %s2 = inlined_call_operand.vmem [shape: bf16[128,256], index: 2, kind: input, shape index: {}]
  %s3 = inlined_call_operand.vmem [shape: f32[3,128], index: 3, kind: input, shape index: {}]
  %s4 = inlined_call_operand.vmem [shape: f32[8,128], index: 4, kind: output, shape index: {}]
  %s5 = sld [smem:[#allocation0]]
  $region26: #{image_classifier_forward.1} parent=0
    _
  %s7 = ssub.s32 1, %s5
  %s8 = scalar_select 0, %s7, %s5
  // Predicated region
  $region2: #{image_classifier_forward.1} parent=0 // pred_check
    _
  $region3: #{image_classifier_forward.1} parent=0 // pred_check_branch
    %10 = sbr.rel (0) target = $region5
  $region4: #{image_classifier_forward.1} parent=0 // pred_region
    _
  $region5: #{image_classifier_forward.1} parent=0 // pred_fallthru
    _
  // Predicated region
  $region6: #{image_classifier_forward.1} parent=0 // pred_check
    _
  $region7: #{image_classifier_forward.1} parent=0 // pred_check_branch
    %12 = sbr.rel (0) target = $region9
  $region8: #{image_classifier_forward.1} parent=0 // pred_region
    _
  $region9: #{image_classifier_forward.1} parent=0 // pred_fallthru
    _
  // Predicated region
  $region10: #{image_classifier_forward.1} parent=0 // pred_check
    _
  $region11: #{image_classifier_forward.1} parent=0 // pred_check_branch
    %14 = sbr.rel (0) target = $region13
  $region12: #{image_classifier_forward.1} parent=0 // pred_region
    _
  $region13: #{image_classifier_forward.1} parent=0 // pred_fallthru
    _
  // Predicated region
  $region14: #{image_classifier_forward.1} parent=0 // pred_check
    _
  $region15: #{image_classifier_forward.1} parent=0 // pred_check_branch
    %16 = sbr.rel (0) target = $region17
  $region16: #{image_classifier_forward.1} parent=0 // pred_region
    _
  $region17: #{image_classifier_forward.1} parent=0 // pred_fallthru
    _
  %v18 = vld [vmem:[%s0] sm:$0xff]
  %v19 = vld [vmem:[%s1] sm:$0xf]
  %v20 = vld [vmem:[%s1 + $0x4] sm:$0xf]
  %v21 = vld [vmem:[%s1 + $0x8] sm:$0xf]
  %v22 = vld [vmem:[%s1 + $0xc] sm:$0xf]
  %v23 = vld [vmem:[%s1 + $0x10] sm:$0xf]
  %v24 = vld [vmem:[%s1 + $0x14] sm:$0xf]
  %v25 = vld [vmem:[%s1 + $0x18] sm:$0xf]
  %v26 = vld [vmem:[%s1 + $0x1c] sm:$0xf]
  %v27 = vld [vmem:[%s1 + $0x20] sm:$0xf]
  %v28 = vld [vmem:[%s1 + $0x24] sm:$0xf]
  %v29 = vld [vmem:[%s1 + $0x28] sm:$0xf]
  %v30 = vld [vmem:[%s1 + $0x2c] sm:$0xf]
  %v31 = vld [vmem:[%s1 + $0x30] sm:$0xf]
  %v32 = vld [vmem:[%s1 + $0x34] sm:$0xf]
  %v33 = vld [vmem:[%s1 + $0x38] sm:$0xf]
  %v34 = vld [vmem:[%s1 + $0x3c] sm:$0xf]
  %v35 = vld [vmem:[%s1 + $0x40] sm:$0xf]
  %v36 = vld [vmem:[%s1 + $0x44] sm:$0xf]
  %v37 = vld [vmem:[%s1 + $0x48] sm:$0xf]
  %v38 = vld [vmem:[%s1 + $0x4c] sm:$0xf]
  %v39 = vld [vmem:[%s1 + $0x50] sm:$0xf]
  %v40 = vld [vmem:[%s1 + $0x54] sm:$0xf]
  %v41 = vld [vmem:[%s1 + $0x58] sm:$0xf]
  %v42 = vld [vmem:[%s1 + $0x5c] sm:$0xf]
  %v43 = vld [vmem:[%s1 + $0x60] sm:$0xf]
  %v44 = vld [vmem:[%s1 + $0x64] sm:$0xf]
  %v45 = vld [vmem:[%s1 + $0x68] sm:$0xf]
  %v46 = vld [vmem:[%s1 + $0x6c] sm:$0xf]
  %v47 = vld [vmem:[%s1 + $0x70] sm:$0xf]
  %v48 = vld [vmem:[%s1 + $0x74] sm:$0xf]
  %v49 = vld [vmem:[%s1 + $0x78] sm:$0xf]
  %v50 = vld [vmem:[%s1 + $0x7c] sm:$0xf]
  %v51 = vld [vmem:[%s3] sm:$0x1]
  %v52 = vlaneseq
  %v53 = vshrl.u32 %v52, 7
  %v54 = vsub.s32 0, %v53
  %v55 = vrot.slane %v51, %v54
  %v57 = vunpack.c.l.b16 %v18
  %v58 = vunpack.c.h.b16 %v18
  %v59 = vpack.c.b16 %v57, %v57
  %v60 = vpack.c.b16 %v58, %v58
  %v95 = vunpack.c.l.b16 %v19
  %v96 = vunpack.c.l.b16 %v20
  %v97 = vunpack.c.l.b16 %v21
  %v98 = vunpack.c.l.b16 %v22
  %v99 = vunpack.c.l.b16 %v23
  %v100 = vunpack.c.l.b16 %v24
  %v101 = vunpack.c.l.b16 %v25
  %v102 = vunpack.c.l.b16 %v26
  %v103 = vunpack.c.l.b16 %v27
  %v104 = vunpack.c.l.b16 %v28
  %v105 = vunpack.c.l.b16 %v29
  %v106 = vunpack.c.l.b16 %v30
  %v107 = vunpack.c.l.b16 %v31
  %v108 = vunpack.c.l.b16 %v32
  %v109 = vunpack.c.l.b16 %v33
  %v110 = vunpack.c.l.b16 %v34
  %v111 = vunpack.c.l.b16 %v35
  %v112 = vunpack.c.l.b16 %v36
  %v113 = vunpack.c.l.b16 %v37
  %v114 = vunpack.c.l.b16 %v38
  %v115 = vunpack.c.l.b16 %v39
  %v116 = vunpack.c.l.b16 %v40
  %v117 = vunpack.c.l.b16 %v41
  %v118 = vunpack.c.l.b16 %v42
  %v119 = vunpack.c.l.b16 %v43
  %v120 = vunpack.c.l.b16 %v44
  %v121 = vunpack.c.l.b16 %v45
  %v122 = vunpack.c.l.b16 %v46
  %v123 = vunpack.c.l.b16 %v47
  %v124 = vunpack.c.l.b16 %v48
  %v125 = vunpack.c.l.b16 %v49
  %v126 = vunpack.c.l.b16 %v50
  %v127 = vpack.c.b16 %v96, %v95
  %v128 = vpack.c.b16 %v98, %v97
  %v129 = vpack.c.b16 %v100, %v99
  %v130 = vpack.c.b16 %v102, %v101
  %v131 = vpack.c.b16 %v104, %v103
  %v132 = vpack.c.b16 %v106, %v105
  %v133 = vpack.c.b16 %v108, %v107
  %v134 = vpack.c.b16 %v110, %v109
  %v135 = vpack.c.b16 %v112, %v111
  %v136 = vpack.c.b16 %v114, %v113
  %v137 = vpack.c.b16 %v116, %v115
  %v138 = vpack.c.b16 %v118, %v117
  %v139 = vpack.c.b16 %v120, %v119
  %v140 = vpack.c.b16 %v122, %v121
  %v141 = vpack.c.b16 %v124, %v123
  %v142 = vpack.c.b16 %v126, %v125
  %159 = vmatprep.subr.bf16.mxu0 0
  %160 = vmatpush1.bf16.msra.mxu0 %v127
  %161 = vmatprep.subr.bf16.mxu0 0
  %162 = vmatpush1.bf16.msra.mxu0 %v128
  %163 = vmatprep.subr.bf16.mxu0 0
  %164 = vmatpush1.bf16.msra.mxu0 %v129
  %165 = vmatprep.subr.bf16.mxu0 0
  %166 = vmatpush1.bf16.msra.mxu0 %v130
  %167 = vmatprep.subr.bf16.mxu0 0
  %168 = vmatpush1.bf16.msra.mxu0 %v131
  %169 = vmatprep.subr.bf16.mxu0 0
  %170 = vmatpush1.bf16.msra.mxu0 %v132
  %171 = vmatprep.subr.bf16.mxu0 0
  %172 = vmatpush1.bf16.msra.mxu0 %v133
  %173 = vmatprep.subr.bf16.mxu0 0
  %174 = vmatpush1.bf16.msra.mxu0 %v134
  %175 = vmatprep.subr.bf16.mxu0 0
  %176 = vmatpush1.bf16.msra.mxu0 %v135
  %177 = vmatprep.subr.bf16.mxu0 0
  %178 = vmatpush1.bf16.msra.mxu0 %v136
  %179 = vmatprep.subr.bf16.mxu0 0
  %180 = vmatpush1.bf16.msra.mxu0 %v137
  %181 = vmatprep.subr.bf16.mxu0 0
  %182 = vmatpush1.bf16.msra.mxu0 %v138
  %183 = vmatprep.subr.bf16.mxu0 0
  %184 = vmatpush1.bf16.msra.mxu0 %v139
  %185 = vmatprep.subr.bf16.mxu0 0
  %186 = vmatpush1.bf16.msra.mxu0 %v140
  %187 = vmatprep.subr.bf16.mxu0 0
  %188 = vmatpush1.bf16.msra.mxu0 %v141
  %189 = vmatprep.subr.bf16.mxu0 0
  %190 = vmatpush1.bf16.msra.mxu0 %v142
  %191 = vmatprep.mubr.bf16.mxu0 %v60
  %192 = vmatmul.mubr.bf16.gmra.mrb[0].mxu0 %v59
  %v193 = vpop.f32.mrb[0].mxu0
  %v194 = vadd.f32 %v55, %v193
  %v195 = vpop.f32.mrb[0].mxu0
  %v196 = vpop.f32.mrb[0].mxu0
  %v197 = vpop.f32.mrb[0].mxu0
  %198 = vdwg.mxu0
  %v199 = vmul.f32 %v194, %v194
  %v200 = vmul.f32 %v194, %v199
  %v201 = vmul.f32 %v200, 0.044715
  %v202 = vadd.f32 %v194, %v201
  %v203 = vmul.f32 %v202, 0.7978846
  %v204 = vtanh.pop %v203
  %v205 = vadd.f32 %v204, 1.0
  %v206 = vmul.f32 %v205, 0.5
  %v207 = vmul.f32 %v194, %v206
  %v208 = vlaneseq
  %v209 = vshrl.u32 %v208, 7
  %v210 = vlaneseq
  %v211 = vand.u32 %v210, 127
  %v212 = vmul.u32 %v209, 4
  %vm213 = vcmp.ge.s32.totalorder %v211, %v212
  %v214 = vadd.s32 %v212, 4
  %vm215 = vcmp.lt.s32.totalorder %v211, %v214
  %vm216 = vmand %vm213, %vm215
  %vm217 = vcmp.lt.s32.totalorder %v209, 2
  %vm218 = vmand %vm216, %vm217
  %v219 = vsel %vm218, 0.25, 0.0
  %vm220 = vcmask 64512
  %v222 = vsel %vm220, %v219, 0
  %224 = vmatprep.subr.mxu0 0.0
  %225 = vmatpush1.msra.mxu0 %v207
  %226 = vmatprep.subr.mxu0 0.0
  %227 = vmatpush1.msra.mxu0 0.0
  %228 = vmatprep.subr.mxu0 0.0
  %229 = vmatpush1.msra.mxu0 0.0
  %230 = vmatprep.subr.mxu0 0.0
  %231 = vmatpush1.msra.mxu0 0.0
  %232 = vmatprep.subr.mxu0 0.0
  %233 = vmatpush1.msra.mxu0 0.0
  %234 = vmatprep.subr.mxu0 0.0
  %235 = vmatpush1.msra.mxu0 0.0
  %236 = vmatprep.subr.mxu0 0.0
  %237 = vmatpush1.msra.mxu0 0.0
  %238 = vmatprep.subr.mxu0 0.0
  %239 = vmatpush1.msra.mxu0 0.0
  %240 = vmatprep.subr.mxu0 0.0
  %241 = vmatpush1.msra.mxu0 0.0
  %242 = vmatprep.subr.mxu0 0.0
  %243 = vmatpush1.msra.mxu0 0.0
  %244 = vmatprep.subr.mxu0 0.0
  %245 = vmatpush1.msra.mxu0 0.0
  %246 = vmatprep.subr.mxu0 0.0
  %247 = vmatpush1.msra.mxu0 0.0
  %248 = vmatprep.subr.mxu0 0.0
  %249 = vmatpush1.msra.mxu0 0.0
  %250 = vmatprep.subr.mxu0 0.0
  %251 = vmatpush1.msra.mxu0 0.0
  %252 = vmatprep.subr.mxu0 0.0
  %253 = vmatpush1.msra.mxu0 0.0
  %254 = vmatprep.subr.mxu0 0.0
  %255 = vmatpush1.msra.mxu0 0.0
  %256 = vmatprep.subr.mxu0 0.0
  %257 = vmatpush1.msra.mxu0 0.0
  %258 = vmatprep.subr.mxu0 0.0
  %259 = vmatpush1.msra.mxu0 0.0
  %260 = vmatprep.subr.mxu0 0.0
  %261 = vmatpush1.msra.mxu0 0.0
  %262 = vmatprep.subr.mxu0 0.0
  %263 = vmatpush1.msra.mxu0 0.0
  %264 = vmatprep.subr.mxu0 0.0
  %265 = vmatpush1.msra.mxu0 0.0
  %266 = vmatprep.subr.mxu0 0.0
  %267 = vmatpush1.msra.mxu0 0.0
  %268 = vmatprep.subr.mxu0 0.0
  %269 = vmatpush1.msra.mxu0 0.0
  %270 = vmatprep.subr.mxu0 0.0
  %271 = vmatpush1.msra.mxu0 0.0
  %272 = vmatprep.subr.mxu0 0.0
  %273 = vmatpush1.msra.mxu0 0.0
  %274 = vmatprep.subr.mxu0 0.0
  %275 = vmatpush1.msra.mxu0 0.0
  %276 = vmatprep.subr.mxu0 0.0
  %277 = vmatpush1.msra.mxu0 0.0
  %278 = vmatprep.subr.mxu0 0.0
  %279 = vmatpush1.msra.mxu0 0.0
  %280 = vmatprep.subr.mxu0 0.0
  %281 = vmatpush1.msra.mxu0 0.0
  %282 = vmatprep.subr.mxu0 0.0
  %283 = vmatpush1.msra.mxu0 0.0
  %284 = vmatprep.subr.mxu0 0.0
  %285 = vmatpush1.msra.mxu0 0.0
  %286 = vmatprep.subr.mxu0 0.0
  %287 = vmatpush1.msra.mxu0 0.0
  %288 = vmatprep.mubr.f32.mxu0 0.0
  %289 = vmatmul.mubr.f32.gmra.mrb[0].mxu0 %v222
  %v290 = vpop.f32.mrb[0].mxu0
  %v291 = vadd.f32 0.0, %v290
  %v292 = vpop.f32.mrb[0].mxu0
  %293 = vdwg.mxu0
  %v294 = vpack.c.bf16 %v291, %v291
  %v295 = vld [vmem:[%s2] sm:$0xf]
  %v296 = vld [vmem:[%s2 + $0x8] sm:$0xf]
  %v297 = vld [vmem:[%s2 + $0x10] sm:$0xf]
  %v298 = vld [vmem:[%s2 + $0x18] sm:$0xf]
  %v299 = vld [vmem:[%s2 + $0x20] sm:$0xf]
  %v300 = vld [vmem:[%s2 + $0x28] sm:$0xf]
  %v301 = vld [vmem:[%s2 + $0x30] sm:$0xf]
  %v302 = vld [vmem:[%s2 + $0x38] sm:$0xf]
  %v303 = vld [vmem:[%s2 + $0x40] sm:$0xf]
  %v304 = vld [vmem:[%s2 + $0x48] sm:$0xf]
  %v305 = vld [vmem:[%s2 + $0x50] sm:$0xf]
  %v306 = vld [vmem:[%s2 + $0x58] sm:$0xf]
  %v307 = vld [vmem:[%s2 + $0x60] sm:$0xf]
  %v308 = vld [vmem:[%s2 + $0x68] sm:$0xf]
  %v309 = vld [vmem:[%s2 + $0x70] sm:$0xf]
  %v310 = vld [vmem:[%s2 + $0x78] sm:$0xf]
  %v311 = vld [vmem:[%s3 + $0x1] sm:$0x1]
  %v312 = vlaneseq
  %v313 = vshrl.u32 %v312, 7
  %v314 = vsub.s32 0, %v313
  %v315 = vrot.slane %v311, %v314
  %v332 = vunpack.c.l.b16 %v295
  %v333 = vunpack.c.l.b16 %v296
  %v334 = vunpack.c.l.b16 %v297
  %v335 = vunpack.c.l.b16 %v298
  %v336 = vunpack.c.l.b16 %v299
  %v337 = vunpack.c.l.b16 %v300
  %v338 = vunpack.c.l.b16 %v301
  %v339 = vunpack.c.l.b16 %v302
  %v340 = vunpack.c.l.b16 %v303
  %v341 = vunpack.c.l.b16 %v304
  %v342 = vunpack.c.l.b16 %v305
  %v343 = vunpack.c.l.b16 %v306
  %v344 = vunpack.c.l.b16 %v307
  %v345 = vunpack.c.l.b16 %v308
  %v346 = vunpack.c.l.b16 %v309
  %v347 = vunpack.c.l.b16 %v310
  %v348 = vpack.c.b16 %v333, %v332
  %v349 = vpack.c.b16 %v335, %v334
  %v350 = vpack.c.b16 %v337, %v336
  %v351 = vpack.c.b16 %v339, %v338
  %v352 = vpack.c.b16 %v341, %v340
  %v353 = vpack.c.b16 %v343, %v342
  %v354 = vpack.c.b16 %v345, %v344
  %v355 = vpack.c.b16 %v347, %v346
  %364 = vmatprep.subr.bf16.mxu0 0
  %365 = vmatpush1.bf16.msra.mxu0 %v348
  %366 = vmatprep.subr.bf16.mxu0 0
  %367 = vmatpush1.bf16.msra.mxu0 %v349
  %368 = vmatprep.subr.bf16.mxu0 0
  %369 = vmatpush1.bf16.msra.mxu0 %v350
  %370 = vmatprep.subr.bf16.mxu0 0
  %371 = vmatpush1.bf16.msra.mxu0 %v351
  %372 = vmatprep.subr.bf16.mxu0 0
  %373 = vmatpush1.bf16.msra.mxu0 %v352
  %374 = vmatprep.subr.bf16.mxu0 0
  %375 = vmatpush1.bf16.msra.mxu0 %v353
  %376 = vmatprep.subr.bf16.mxu0 0
  %377 = vmatpush1.bf16.msra.mxu0 %v354
  %378 = vmatprep.subr.bf16.mxu0 0
  %379 = vmatpush1.bf16.msra.mxu0 %v355
  %380 = vmatprep.subr.bf16.mxu0 0
  %381 = vmatpush1.bf16.msra.mxu0 0
  %382 = vmatprep.subr.bf16.mxu0 0
  %383 = vmatpush1.bf16.msra.mxu0 0
  %384 = vmatprep.subr.bf16.mxu0 0
  %385 = vmatpush1.bf16.msra.mxu0 0
  %386 = vmatprep.subr.bf16.mxu0 0
  %387 = vmatpush1.bf16.msra.mxu0 0
  %388 = vmatprep.subr.bf16.mxu0 0
  %389 = vmatpush1.bf16.msra.mxu0 0
  %390 = vmatprep.subr.bf16.mxu0 0
  %391 = vmatpush1.bf16.msra.mxu0 0
  %392 = vmatprep.subr.bf16.mxu0 0
  %393 = vmatpush1.bf16.msra.mxu0 0
  %394 = vmatprep.subr.bf16.mxu0 0
  %395 = vmatpush1.bf16.msra.mxu0 0
  %396 = vmatprep.mubr.bf16.mxu0 0
  %397 = vmatmul.mubr.bf16.gmra.mrb[0].mxu0 %v294
  %v398 = vpop.f32.mrb[0].mxu0
  %v399 = vadd.f32 %v315, %v398
  %v400 = vpop.f32.mrb[0].mxu0
  %v401 = vpop.f32.mrb[0].mxu0
  %v402 = vpop.f32.mrb[0].mxu0
  %403 = vdwg.mxu0
  %vm404 = vcmp.lt.s32.totalorder %v211, 32
  %v405 = vsel %vm404, %v399, 0.0
  %v406 = vmul.f32 %v405, %v405
  %407 = vadd.xlane.f32.xlu0 %v406
  %v408 = vpop.xlane.xlu0 %407
  %v409 = vmax.f32 %v408, 1e-24
  %v410 = vrsqrt.pop %v409
  %v411 = vmul.f32 %v405, %v410
  %v412 = vpack.c.bf16 %v411, %v411
  %v413 = vld [vmem:[%s2 + $0x4] sm:$0xf]
  %v414 = vld [vmem:[%s2 + $0xc] sm:$0xf]
  %v415 = vld [vmem:[%s2 + $0x14] sm:$0xf]
  %v416 = vld [vmem:[%s2 + $0x1c] sm:$0xf]
  %v417 = vld [vmem:[%s2 + $0x24] sm:$0xf]
  %v418 = vld [vmem:[%s2 + $0x2c] sm:$0xf]
  %v419 = vld [vmem:[%s2 + $0x34] sm:$0xf]
  %v420 = vld [vmem:[%s2 + $0x3c] sm:$0xf]
  %v421 = vld [vmem:[%s2 + $0x44] sm:$0xf]
  %v422 = vld [vmem:[%s2 + $0x4c] sm:$0xf]
  %v423 = vld [vmem:[%s2 + $0x54] sm:$0xf]
  %v424 = vld [vmem:[%s2 + $0x5c] sm:$0xf]
  %v425 = vld [vmem:[%s2 + $0x64] sm:$0xf]
  %v426 = vld [vmem:[%s2 + $0x6c] sm:$0xf]
  %v427 = vld [vmem:[%s2 + $0x74] sm:$0xf]
  %v428 = vld [vmem:[%s2 + $0x7c] sm:$0xf]
  %v429 = vld [vmem:[%s3 + $0x2] sm:$0x1]
  %v430 = vlaneseq
  %v431 = vshrl.u32 %v430, 7
  %v432 = vsub.s32 0, %v431
  %v433 = vrot.slane %v429, %v432
  %v450 = vunpack.c.l.b16 %v413
  %v451 = vunpack.c.l.b16 %v414
  %v452 = vunpack.c.l.b16 %v415
  %v453 = vunpack.c.l.b16 %v416
  %v454 = vunpack.c.l.b16 %v417
  %v455 = vunpack.c.l.b16 %v418
  %v456 = vunpack.c.l.b16 %v419
  %v457 = vunpack.c.l.b16 %v420
  %v458 = vunpack.c.l.b16 %v421
  %v459 = vunpack.c.l.b16 %v422
  %v460 = vunpack.c.l.b16 %v423
  %v461 = vunpack.c.l.b16 %v424
  %v462 = vunpack.c.l.b16 %v425
  %v463 = vunpack.c.l.b16 %v426
  %v464 = vunpack.c.l.b16 %v427
  %v465 = vunpack.c.l.b16 %v428
  %v466 = vpack.c.b16 %v451, %v450
  %v467 = vpack.c.b16 %v453, %v452
  %v468 = vpack.c.b16 %v455, %v454
  %v469 = vpack.c.b16 %v457, %v456
  %v470 = vpack.c.b16 %v459, %v458
  %v471 = vpack.c.b16 %v461, %v460
  %v472 = vpack.c.b16 %v463, %v462
  %v473 = vpack.c.b16 %v465, %v464
  %482 = vmatprep.subr.bf16.mxu0 0
  %483 = vmatpush1.bf16.msra.mxu0 %v466
  %484 = vmatprep.subr.bf16.mxu0 0
  %485 = vmatpush1.bf16.msra.mxu0 %v467
  %486 = vmatprep.subr.bf16.mxu0 0
  %487 = vmatpush1.bf16.msra.mxu0 %v468
  %488 = vmatprep.subr.bf16.mxu0 0
  %489 = vmatpush1.bf16.msra.mxu0 %v469
  %490 = vmatprep.subr.bf16.mxu0 0
  %491 = vmatpush1.bf16.msra.mxu0 %v470
  %492 = vmatprep.subr.bf16.mxu0 0
  %493 = vmatpush1.bf16.msra.mxu0 %v471
  %494 = vmatprep.subr.bf16.mxu0 0
  %495 = vmatpush1.bf16.msra.mxu0 %v472
  %496 = vmatprep.subr.bf16.mxu0 0
  %497 = vmatpush1.bf16.msra.mxu0 %v473
  %498 = vmatprep.subr.bf16.mxu0 0
  %499 = vmatpush1.bf16.msra.mxu0 0
  %500 = vmatprep.subr.bf16.mxu0 0
  %501 = vmatpush1.bf16.msra.mxu0 0
  %502 = vmatprep.subr.bf16.mxu0 0
  %503 = vmatpush1.bf16.msra.mxu0 0
  %504 = vmatprep.subr.bf16.mxu0 0
  %505 = vmatpush1.bf16.msra.mxu0 0
  %506 = vmatprep.subr.bf16.mxu0 0
  %507 = vmatpush1.bf16.msra.mxu0 0
  %508 = vmatprep.subr.bf16.mxu0 0
  %509 = vmatpush1.bf16.msra.mxu0 0
  %510 = vmatprep.subr.bf16.mxu0 0
  %511 = vmatpush1.bf16.msra.mxu0 0
  %512 = vmatprep.subr.bf16.mxu0 0
  %513 = vmatpush1.bf16.msra.mxu0 0
  %514 = vmatprep.mubr.bf16.mxu0 0
  %515 = vmatmul.mubr.bf16.gmra.mrb[0].mxu0 %v412
  %v516 = vpop.f32.mrb[0].mxu0
  %v517 = vadd.f32 %v433, %v516
  %v518 = vpop.f32.mrb[0].mxu0
  %v519 = vpop.f32.mrb[0].mxu0
  %v520 = vpop.f32.mrb[0].mxu0
  %521 = vdwg.mxu0
  %522 = vst [vmem:[%s4] sm:$0xff] %v517
  // Predicated region
  $region18: #{image_classifier_forward.1} parent=0 // pred_check
    _
  $region19: #{image_classifier_forward.1} parent=0 // pred_check_branch
    %524 = sbr.rel (0) target = $region21
  $region20: #{image_classifier_forward.1} parent=0 // pred_region
    _
  $region21: #{image_classifier_forward.1} parent=0 // pred_fallthru
    _
  // Predicated region
  $region22: #{image_classifier_forward.1} parent=0 // pred_check
    _
  $region23: #{image_classifier_forward.1} parent=0 // pred_check_branch
    %526 = sbr.rel (0) target = $region25
  $region24: #{image_classifier_forward.1} parent=0 // pred_region
    _
  $region25: #{image_classifier_forward.1} parent=0 // pred_fallthru
    _

</llo_original>
